<compile_context>
chip_gen: v5e
topology: v5e:2x2
jax: 0.10.0
libtpu: 0.0.40
codegen_flags: <defaults>
</compile_context>

<pallas_src>
import functools

import jax
import jax.numpy as jnp
from jax.experimental import pallas as pl
from jax.experimental.pallas import tpu as pltpu


def _round_up(n, m):
    return ((n + m - 1) // m) * m


def _pick_batch_tile(batch):
    """Largest batch tile (<=128, multiple of 8 when actually tiling) dividing batch."""
    if batch <= 8:
        return batch
    for bt in (128, 64, 32, 16, 8):
        if batch % bt == 0:
            return bt
    return batch  # fallback: single tile


# ----------------------------------------------------------------------------
# Fully fused kernel: quantize -> conv(3x3,pad=1) -> quant -> relu -> flatten
#                     -> fc1 -> quant -> relu -> fc2 -> quant -> /scale
# ----------------------------------------------------------------------------
def _fused_qnet_kernel(p_ref, wc_ref, bc_ref, w1_ref, b1_ref, w2_ref, b2_ref,
                       o_ref, flat_ref, *, scale, bt, hw, cout):
    # p_ref : (9*cin, Bt*HW)      im2col patches, rows (ci,ky,kx), cols (b,h,w)
    # wc_ref: (cout, 9*cin)       conv weights, cols (ci,ky,kx) (PyTorch order)
    # bc_ref: (cout, 1)
    # w1_ref: (cout, HW, Hpad)    fc1 weights, hidden zero-padded to 128
    # b1_ref: (1, Hpad)
    # w2_ref: (Hpad, Npad)
    # b2_ref: (1, Npad)
    # o_ref : (Bt, Npad)
    # flat_ref (scratch): (Bt, cout, HW)
    inv = 1.0 / scale            # scale is an exact power of two -> bit-exact mul
    hpad = w1_ref.shape[-1]

    # Input quantization (conv zero-padding stays zero: round(0*scale) == 0).
    pq = jnp.round(p_ref[...] * scale)

    # Conv as ONE (cout, 9*cin) @ (9*cin, Bt*HW) matmul, lane-dense N.
    y = jnp.dot(wc_ref[...], pq, preferred_element_type=jnp.float32) + bc_ref[...]
    y = jnp.maximum(jnp.round(y * inv), 0.0)          # post-Conv2d quant + ReLU

    # Flatten to PyTorch (c,h,w) order with Bt dense (cout, HW) block stores
    # (static lane offsets, multiples of HW=256 -> unmasked full-tile stores).
    for b in range(bt):
        flat_ref[b] = y[:, b * hw:(b + 1) * hw]

    # fc1: contract over (cout, HW) as an unrolled sum of `cout` 2-D K=HW
    # matmuls (same MXU passes as a single K=cout*HW dot; no in-kernel
    # (Bt, cout*HW) re-layout, no multi-contracting-dim dot_general).
    h1 = jnp.zeros((bt, hpad), jnp.float32)
    for c in range(cout):
        h1 = h1 + jnp.dot(flat_ref[:, c, :], w1_ref[c],
                          preferred_element_type=jnp.float32)
    h1 = h1 + b1_ref[...]
    h1 = jnp.maximum(jnp.round(h1 * inv), 0.0)        # post-fc1 quant + ReLU

    # fc2 -> quant -> final /scale.  Padded hidden/class lanes stay exactly 0.
    h2 = jnp.dot(h1, w2_ref[...], preferred_element_type=jnp.float32) + b2_ref[...]
    o_ref[...] = jnp.round(h2 * inv) * inv


# ----------------------------------------------------------------------------
# Wrapper-side im2col: a single XLA op (identity grouped conv), exact for f32.
# Emits (9*cin, B*H*W) with rows ordered (ci, ky, kx) and columns (b, h, w).
# ----------------------------------------------------------------------------
def _im2col_transposed(x_nchw, ksize=3):
    B, cin, H, W = x_nchw.shape
    patches = jax.lax.conv_general_dilated_patches(
        x_nchw, filter_shape=(ksize, ksize), window_strides=(1, 1),
        padding="SAME",
        dimension_numbers=("NCHW", "OIHW", "CNHW"),
        precision=jax.lax.Precision.HIGHEST)          # keep the gather bit-exact
    # patches: (cin*ksize*ksize, B, H, W), channel order (ci, ky, kx)
    return patches.reshape(cin * ksize * ksize, B * H * W)


# ----------------------------------------------------------------------------
# One-time parameter packing (layout prep + lane padding, zero per-call cost).
# ----------------------------------------------------------------------------
def prepare_params(params):
    conv_w = params["conv_w"]                         # (3, 3, cin, cout)  (HWIO)
    kh, kw, cin, cout = conv_w.shape
    in_feat, hidden = params["fc1_w"].shape
    hw = in_feat // cout
    nclass = params["fc2_w"].shape[1]
    hpad = _round_up(hidden, 128)
    npad = _round_up(nclass, 128)

    # Conv weight -> (cout, cin*9), columns ordered (ci, ky, kx) to match the
    # im2col patch rows (== PyTorch weight.reshape(cout, -1) order).
    wc = jnp.transpose(conv_w, (3, 2, 0, 1)).reshape(cout, cin * kh * kw)

    # fc1 weight rows are PyTorch (c, h, w) flatten order -> (cout, HW, hidden),
    # hidden zero-padded to a lane-dense 128.
    w1 = params["fc1_w"].reshape(cout, hw, hidden)
    w1 = jnp.pad(w1, ((0, 0), (0, 0), (0, hpad - hidden)))
    b1 = jnp.pad(params["fc1_b"], (0, hpad - hidden)).reshape(1, hpad)
    w2 = jnp.pad(params["fc2_w"], ((0, hpad - hidden), (0, npad - nclass)))
    b2 = jnp.pad(params["fc2_b"], (0, npad - nclass)).reshape(1, npad)

    return {
        "wc": wc,
        "bc": params["conv_b"].reshape(cout, 1),
        "w1": w1, "b1": b1, "w2": w2, "b2": b2,
    }


# ----------------------------------------------------------------------------
# QuantizedNet forward: one pallas_call over a "parallel" batch-tile grid;
# everything VMEM-resident (~1.3 MiB weights + ~90 KiB activations per tile).
# ----------------------------------------------------------------------------
@functools.partial(jax.jit, static_argnames=("q_value", "nclass"))
def quantized_net_forward(x_nchw, packed, q_value, nclass):
    scale = float(2.0 ** q_value)
    B, cin, H, W = x_nchw.shape
    hw = H * W
    cout, k2cin = packed["wc"].shape
    hpad = packed["w1"].shape[-1]
    npad = packed["w2"].shape[-1]

    p_t = _im2col_transposed(x_nchw)                  # (9*cin, B*HW)

    bt = _pick_batch_tile(B)
    grid = (B // bt,)

    kernel = functools.partial(_fused_qnet_kernel,
                               scale=scale, bt=bt, hw=hw, cout=cout)
    out_padded = pl.pallas_call(
        kernel,
        out_shape=jax.ShapeDtypeStruct((B, npad), jnp.float32),
        grid_spec=pltpu.PrefetchScalarGridSpec(
            num_scalar_prefetch=0,
            grid=grid,
            in_specs=[
                pl.BlockSpec((k2cin, bt * hw), lambda i: (0, i)),     # patches
                pl.BlockSpec((cout, k2cin), lambda i: (0, 0)),        # conv W
                pl.BlockSpec((cout, 1), lambda i: (0, 0)),            # conv b
                pl.BlockSpec((cout, hw, hpad), lambda i: (0, 0, 0)),  # fc1 W
                pl.BlockSpec((1, hpad), lambda i: (0, 0)),            # fc1 b
                pl.BlockSpec((hpad, npad), lambda i: (0, 0)),         # fc2 W
                pl.BlockSpec((1, npad), lambda i: (0, 0)),            # fc2 b
            ],
            out_specs=pl.BlockSpec((bt, npad), lambda i: (i, 0)),
            scratch_shapes=[pltpu.VMEM((bt, cout, hw), jnp.float32)],
        ),
        compiler_params=pltpu.CompilerParams(
            dimension_semantics=("parallel",)),
    )(p_t, packed["wc"], packed["bc"], packed["w1"], packed["b1"],
      packed["w2"], packed["b2"])
    return out_padded[:, :nclass]


# ----------------------------------------------------------------------------
# Pure-JAX reference (for self-validation only).
# ----------------------------------------------------------------------------
def reference_forward(x_nchw, params, q_value):
    scale = 2.0 ** q_value
    xq = jnp.round(x_nchw * scale)
    y = jax.lax.conv_general_dilated(
        xq, params["conv_w"], (1, 1), "SAME",
        dimension_numbers=("NCHW", "HWIO", "NCHW"))
    y = y + params["conv_b"].reshape(1, -1, 1, 1)
    y = jnp.maximum(jnp.round(y / scale), 0.0)
    h = y.reshape(y.shape[0], -1)                     # NCHW flatten = (c,h,w) order
    h = jnp.maximum(jnp.round((h @ params["fc1_w"] + params["fc1_b"]) / scale), 0.0)
    h = jnp.round((h @ params["fc2_w"] + params["fc2_b"]) / scale)
    return h / scale


def init_params(key, cin=4, cout=8, H=16, W=16, hidden=32, nclass=10):
    k = jax.random.split(key, 6)
    return {
        "conv_w": jax.random.normal(k[0], (3, 3, cin, cout), jnp.float32) * 0.1,
        "conv_b": jax.random.normal(k[1], (cout,), jnp.float32) * 0.1,
        "fc1_w": jax.random.normal(k[2], (cout * H * W, hidden), jnp.float32) * 0.02,
        "fc1_b": jax.random.normal(k[3], (hidden,), jnp.float32) * 0.1,
        "fc2_w": jax.random.normal(k[4], (hidden, nclass), jnp.float32) * 0.1,
        "fc2_b": jax.random.normal(k[5], (nclass,), jnp.float32) * 0.1,
    }


if __name__ == "__main__":
    key = jax.random.PRNGKey(0)
    kx, kp = jax.random.split(key)
    B, C, H, W = 2, 4, 16, 16
    q_value = 8
    nclass = 10

    x = jax.random.normal(kx, (B, C, H, W), jnp.float32)
    params = init_params(kp)
    packed = prepare_params(params)

    out = quantized_net_forward(x, packed, q_value=q_value, nclass=nclass)
    out = jax.block_until_ready(out)

    assert out.shape == (B, nclass) and out.dtype == jnp.float32
    assert bool(jnp.all(jnp.isfinite(out)))
    ref = reference_forward(x, params, q_value)
    assert bool(jnp.max(jnp.abs(out - ref)) < 1e-2), "mismatch vs pure-JAX reference"
    print("KERNEL_OK")
</pallas_src>

<mosaic_0001>
module attributes {stable_mosaic.version = 11 : i64} {
  func.func @_fused_qnet_kernel(%arg0: i32, %arg1: memref<36x512xf32, #tpu.memory_space<vmem>>, %arg2: memref<8x36xf32, #tpu.memory_space<vmem>>, %arg3: memref<8x1xf32, #tpu.memory_space<vmem>>, %arg4: memref<8x256x128xf32, #tpu.memory_space<vmem>>, %arg5: memref<1x128xf32, #tpu.memory_space<vmem>>, %arg6: memref<128x128xf32, #tpu.memory_space<vmem>>, %arg7: memref<1x128xf32, #tpu.memory_space<vmem>>, %arg8: memref<2x128xf32, #tpu.memory_space<vmem>>, %arg9: memref<2x8x256xf32, #tpu.memory_space<vmem>>) attributes {dimension_semantics = [#tpu.dimension_semantics<parallel>], iteration_bounds = array<i64: 1>, scalar_prefetch = 0 : i64, scratch_operands = 1 : i64, tpu.core_type = #tpu.core_type<tc>, window_params = [{transform_indices = @transform_0, window_bounds = array<i64: 36, 512>}, {pipeline_mode = #tpu.pipeline_mode<synchronous>, transform_indices = @transform_1, window_bounds = array<i64: 8, 36>}, {pipeline_mode = #tpu.pipeline_mode<synchronous>, transform_indices = @transform_2, window_bounds = array<i64: 8, 1>}, {pipeline_mode = #tpu.pipeline_mode<synchronous>, transform_indices = @transform_3, window_bounds = array<i64: 8, 256, 128>}, {pipeline_mode = #tpu.pipeline_mode<synchronous>, transform_indices = @transform_4, window_bounds = array<i64: 1, 128>}, {pipeline_mode = #tpu.pipeline_mode<synchronous>, transform_indices = @transform_5, window_bounds = array<i64: 128, 128>}, {pipeline_mode = #tpu.pipeline_mode<synchronous>, transform_indices = @transform_6, window_bounds = array<i64: 1, 128>}, {transform_indices = @transform_7, window_bounds = array<i64: 2, 128>}]} {
    %c0 = arith.constant 0 : index
    %c0_0 = arith.constant 0 : index
    %0 = vector.load %arg1[%c0, %c0_0] : memref<36x512xf32, #tpu.memory_space<vmem>>, vector<36x512xf32>
    %cst = arith.constant 2.560000e+02 : f32
    %1 = vector.broadcast %cst : f32 to vector<36x512xf32>
    %2 = arith.mulf %0, %1 : vector<36x512xf32>
    %3 = math.roundeven %2 : vector<36x512xf32>
    %c0_1 = arith.constant 0 : index
    %c0_2 = arith.constant 0 : index
    %4 = vector.load %arg2[%c0_1, %c0_2] : memref<8x36xf32, #tpu.memory_space<vmem>>, vector<8x36xf32>
    %cst_3 = arith.constant dense<0.000000e+00> : vector<8x512xf32>
    %5 = tpu.matmul %4, %3, %cst_3 {dimension_numbers = #tpu.dot_dimension_numbers<[1], [0], [0], [1], [0, 0, 1, 1], [], []>} : vector<8x36xf32>, vector<36x512xf32>, vector<8x512xf32> -> vector<8x512xf32>
    %c0_4 = arith.constant 0 : index
    %c0_5 = arith.constant 0 : index
    %6 = vector.load %arg3[%c0_4, %c0_5] : memref<8x1xf32, #tpu.memory_space<vmem>>, vector<8x1xf32>
    %7 = vector.broadcast %6 : vector<8x1xf32> to vector<8x512xf32>
    %8 = arith.addf %5, %7 : vector<8x512xf32>
    %cst_6 = arith.constant 3.906250e-03 : f32
    %9 = vector.broadcast %cst_6 : f32 to vector<8x512xf32>
    %10 = arith.mulf %8, %9 : vector<8x512xf32>
    %11 = math.roundeven %10 : vector<8x512xf32>
    %cst_7 = arith.constant 0.000000e+00 : f32
    %12 = vector.broadcast %cst_7 : f32 to vector<8x512xf32>
    %13 = arith.maximumf %11, %12 : vector<8x512xf32>
    %14 = vector.extract_strided_slice %13 {offsets = [0, 0], sizes = [8, 256], strides = [1, 1]} : vector<8x512xf32> to vector<8x256xf32>
    %c0_8 = arith.constant 0 : index
    %c0_9 = arith.constant 0 : index
    %c0_10 = arith.constant 0 : index
    %15 = vector.load %arg9[%c0_8, %c0_9, %c0_10] : memref<2x8x256xf32, #tpu.memory_space<vmem>>, vector<1x8x256xf32>
    %16 = vector.shape_cast %15 : vector<1x8x256xf32> to vector<8x256xf32>
    %17 = vector.shape_cast %14 : vector<8x256xf32> to vector<1x8x256xf32>
    tpu.vector_store %arg9[%c0_8, %c0_9, %c0_10], %17 {strides = array<i32>} : memref<2x8x256xf32, #tpu.memory_space<vmem>>, vector<1x8x256xf32>,
    %18 = vector.extract_strided_slice %13 {offsets = [0, 256], sizes = [8, 256], strides = [1, 1]} : vector<8x512xf32> to vector<8x256xf32>
    %c1 = arith.constant 1 : index
    %c0_11 = arith.constant 0 : index
    %c0_12 = arith.constant 0 : index
    %19 = vector.load %arg9[%c1, %c0_11, %c0_12] : memref<2x8x256xf32, #tpu.memory_space<vmem>>, vector<1x8x256xf32>
    %20 = vector.shape_cast %19 : vector<1x8x256xf32> to vector<8x256xf32>
    %21 = vector.shape_cast %18 : vector<8x256xf32> to vector<1x8x256xf32>
    tpu.vector_store %arg9[%c1, %c0_11, %c0_12], %21 {strides = array<i32>} : memref<2x8x256xf32, #tpu.memory_space<vmem>>, vector<1x8x256xf32>,
    %cst_13 = arith.constant 0.000000e+00 : f32
    %22 = vector.broadcast %cst_13 : f32 to vector<2x128xf32>
    %c0_14 = arith.constant 0 : index
    %c0_15 = arith.constant 0 : index
    %c0_16 = arith.constant 0 : index
    %23 = vector.load %arg9[%c0_14, %c0_15, %c0_16] : memref<2x8x256xf32, #tpu.memory_space<vmem>>, vector<2x1x256xf32>
    %24 = vector.shape_cast %23 : vector<2x1x256xf32> to vector<2x256xf32>
    %c0_17 = arith.constant 0 : index
    %c0_18 = arith.constant 0 : index
    %c0_19 = arith.constant 0 : index
    %25 = vector.load %arg4[%c0_17, %c0_18, %c0_19] : memref<8x256x128xf32, #tpu.memory_space<vmem>>, vector<1x256x128xf32>
    %26 = vector.shape_cast %25 : vector<1x256x128xf32> to vector<256x128xf32>
    %cst_20 = arith.constant dense<0.000000e+00> : vector<2x128xf32>
    %27 = tpu.matmul %24, %26, %cst_20 {dimension_numbers = #tpu.dot_dimension_numbers<[1], [0], [0], [1], [0, 0, 1, 1], [], []>} : vector<2x256xf32>, vector<256x128xf32>, vector<2x128xf32> -> vector<2x128xf32>
    %28 = arith.addf %22, %27 : vector<2x128xf32>
    %c0_21 = arith.constant 0 : index
    %c1_22 = arith.constant 1 : index
    %c0_23 = arith.constant 0 : index
    %29 = vector.load %arg9[%c0_21, %c1_22, %c0_23] : memref<2x8x256xf32, #tpu.memory_space<vmem>>, vector<2x1x256xf32>
    %30 = vector.shape_cast %29 : vector<2x1x256xf32> to vector<2x256xf32>
    %c1_24 = arith.constant 1 : index
    %c0_25 = arith.constant 0 : index
    %c0_26 = arith.constant 0 : index
    %31 = vector.load %arg4[%c1_24, %c0_25, %c0_26] : memref<8x256x128xf32, #tpu.memory_space<vmem>>, vector<1x256x128xf32>
    %32 = vector.shape_cast %31 : vector<1x256x128xf32> to vector<256x128xf32>
    %cst_27 = arith.constant dense<0.000000e+00> : vector<2x128xf32>
    %33 = tpu.matmul %30, %32, %cst_27 {dimension_numbers = #tpu.dot_dimension_numbers<[1], [0], [0], [1], [0, 0, 1, 1], [], []>} : vector<2x256xf32>, vector<256x128xf32>, vector<2x128xf32> -> vector<2x128xf32>
    %34 = arith.addf %28, %33 : vector<2x128xf32>
    %c0_28 = arith.constant 0 : index
    %c2 = arith.constant 2 : index
    %c0_29 = arith.constant 0 : index
    %35 = vector.load %arg9[%c0_28, %c2, %c0_29] : memref<2x8x256xf32, #tpu.memory_space<vmem>>, vector<2x1x256xf32>
    %36 = vector.shape_cast %35 : vector<2x1x256xf32> to vector<2x256xf32>
    %c2_30 = arith.constant 2 : index
    %c0_31 = arith.constant 0 : index
    %c0_32 = arith.constant 0 : index
    %37 = vector.load %arg4[%c2_30, %c0_31, %c0_32] : memref<8x256x128xf32, #tpu.memory_space<vmem>>, vector<1x256x128xf32>
    %38 = vector.shape_cast %37 : vector<1x256x128xf32> to vector<256x128xf32>
    %cst_33 = arith.constant dense<0.000000e+00> : vector<2x128xf32>
    %39 = tpu.matmul %36, %38, %cst_33 {dimension_numbers = #tpu.dot_dimension_numbers<[1], [0], [0], [1], [0, 0, 1, 1], [], []>} : vector<2x256xf32>, vector<256x128xf32>, vector<2x128xf32> -> vector<2x128xf32>
    %40 = arith.addf %34, %39 : vector<2x128xf32>
    %c0_34 = arith.constant 0 : index
    %c3 = arith.constant 3 : index
    %c0_35 = arith.constant 0 : index
    %41 = vector.load %arg9[%c0_34, %c3, %c0_35] : memref<2x8x256xf32, #tpu.memory_space<vmem>>, vector<2x1x256xf32>
    %42 = vector.shape_cast %41 : vector<2x1x256xf32> to vector<2x256xf32>
    %c3_36 = arith.constant 3 : index
    %c0_37 = arith.constant 0 : index
    %c0_38 = arith.constant 0 : index
    %43 = vector.load %arg4[%c3_36, %c0_37, %c0_38] : memref<8x256x128xf32, #tpu.memory_space<vmem>>, vector<1x256x128xf32>
    %44 = vector.shape_cast %43 : vector<1x256x128xf32> to vector<256x128xf32>
    %cst_39 = arith.constant dense<0.000000e+00> : vector<2x128xf32>
    %45 = tpu.matmul %42, %44, %cst_39 {dimension_numbers = #tpu.dot_dimension_numbers<[1], [0], [0], [1], [0, 0, 1, 1], [], []>} : vector<2x256xf32>, vector<256x128xf32>, vector<2x128xf32> -> vector<2x128xf32>
    %46 = arith.addf %40, %45 : vector<2x128xf32>
    %c0_40 = arith.constant 0 : index
    %c4 = arith.constant 4 : index
    %c0_41 = arith.constant 0 : index
    %47 = vector.load %arg9[%c0_40, %c4, %c0_41] : memref<2x8x256xf32, #tpu.memory_space<vmem>>, vector<2x1x256xf32>
    %48 = vector.shape_cast %47 : vector<2x1x256xf32> to vector<2x256xf32>
    %c4_42 = arith.constant 4 : index
    %c0_43 = arith.constant 0 : index
    %c0_44 = arith.constant 0 : index
    %49 = vector.load %arg4[%c4_42, %c0_43, %c0_44] : memref<8x256x128xf32, #tpu.memory_space<vmem>>, vector<1x256x128xf32>
    %50 = vector.shape_cast %49 : vector<1x256x128xf32> to vector<256x128xf32>
    %cst_45 = arith.constant dense<0.000000e+00> : vector<2x128xf32>
    %51 = tpu.matmul %48, %50, %cst_45 {dimension_numbers = #tpu.dot_dimension_numbers<[1], [0], [0], [1], [0, 0, 1, 1], [], []>} : vector<2x256xf32>, vector<256x128xf32>, vector<2x128xf32> -> vector<2x128xf32>
    %52 = arith.addf %46, %51 : vector<2x128xf32>
    %c0_46 = arith.constant 0 : index
    %c5 = arith.constant 5 : index
    %c0_47 = arith.constant 0 : index
    %53 = vector.load %arg9[%c0_46, %c5, %c0_47] : memref<2x8x256xf32, #tpu.memory_space<vmem>>, vector<2x1x256xf32>
    %54 = vector.shape_cast %53 : vector<2x1x256xf32> to vector<2x256xf32>
    %c5_48 = arith.constant 5 : index
    %c0_49 = arith.constant 0 : index
    %c0_50 = arith.constant 0 : index
    %55 = vector.load %arg4[%c5_48, %c0_49, %c0_50] : memref<8x256x128xf32, #tpu.memory_space<vmem>>, vector<1x256x128xf32>
    %56 = vector.shape_cast %55 : vector<1x256x128xf32> to vector<256x128xf32>
    %cst_51 = arith.constant dense<0.000000e+00> : vector<2x128xf32>
    %57 = tpu.matmul %54, %56, %cst_51 {dimension_numbers = #tpu.dot_dimension_numbers<[1], [0], [0], [1], [0, 0, 1, 1], [], []>} : vector<2x256xf32>, vector<256x128xf32>, vector<2x128xf32> -> vector<2x128xf32>
    %58 = arith.addf %52, %57 : vector<2x128xf32>
    %c0_52 = arith.constant 0 : index
    %c6 = arith.constant 6 : index
    %c0_53 = arith.constant 0 : index
    %59 = vector.load %arg9[%c0_52, %c6, %c0_53] : memref<2x8x256xf32, #tpu.memory_space<vmem>>, vector<2x1x256xf32>
    %60 = vector.shape_cast %59 : vector<2x1x256xf32> to vector<2x256xf32>
    %c6_54 = arith.constant 6 : index
    %c0_55 = arith.constant 0 : index
    %c0_56 = arith.constant 0 : index
    %61 = vector.load %arg4[%c6_54, %c0_55, %c0_56] : memref<8x256x128xf32, #tpu.memory_space<vmem>>, vector<1x256x128xf32>
    %62 = vector.shape_cast %61 : vector<1x256x128xf32> to vector<256x128xf32>
    %cst_57 = arith.constant dense<0.000000e+00> : vector<2x128xf32>
    %63 = tpu.matmul %60, %62, %cst_57 {dimension_numbers = #tpu.dot_dimension_numbers<[1], [0], [0], [1], [0, 0, 1, 1], [], []>} : vector<2x256xf32>, vector<256x128xf32>, vector<2x128xf32> -> vector<2x128xf32>
    %64 = arith.addf %58, %63 : vector<2x128xf32>
    %c0_58 = arith.constant 0 : index
    %c7 = arith.constant 7 : index
    %c0_59 = arith.constant 0 : index
    %65 = vector.load %arg9[%c0_58, %c7, %c0_59] : memref<2x8x256xf32, #tpu.memory_space<vmem>>, vector<2x1x256xf32>
    %66 = vector.shape_cast %65 : vector<2x1x256xf32> to vector<2x256xf32>
    %c7_60 = arith.constant 7 : index
    %c0_61 = arith.constant 0 : index
    %c0_62 = arith.constant 0 : index
    %67 = vector.load %arg4[%c7_60, %c0_61, %c0_62] : memref<8x256x128xf32, #tpu.memory_space<vmem>>, vector<1x256x128xf32>
    %68 = vector.shape_cast %67 : vector<1x256x128xf32> to vector<256x128xf32>
    %cst_63 = arith.constant dense<0.000000e+00> : vector<2x128xf32>
    %69 = tpu.matmul %66, %68, %cst_63 {dimension_numbers = #tpu.dot_dimension_numbers<[1], [0], [0], [1], [0, 0, 1, 1], [], []>} : vector<2x256xf32>, vector<256x128xf32>, vector<2x128xf32> -> vector<2x128xf32>
    %70 = arith.addf %64, %69 : vector<2x128xf32>
    %c0_64 = arith.constant 0 : index
    %c0_65 = arith.constant 0 : index
    %71 = vector.load %arg5[%c0_64, %c0_65] : memref<1x128xf32, #tpu.memory_space<vmem>>, vector<1x128xf32>
    %72 = vector.broadcast %71 : vector<1x128xf32> to vector<2x128xf32>
    %73 = arith.addf %70, %72 : vector<2x128xf32>
    %cst_66 = arith.constant 3.906250e-03 : f32
    %74 = vector.broadcast %cst_66 : f32 to vector<2x128xf32>
    %75 = arith.mulf %73, %74 : vector<2x128xf32>
    %76 = math.roundeven %75 : vector<2x128xf32>
    %cst_67 = arith.constant 0.000000e+00 : f32
    %77 = vector.broadcast %cst_67 : f32 to vector<2x128xf32>
    %78 = arith.maximumf %76, %77 : vector<2x128xf32>
    %c0_68 = arith.constant 0 : index
    %c0_69 = arith.constant 0 : index
    %79 = vector.load %arg6[%c0_68, %c0_69] : memref<128x128xf32, #tpu.memory_space<vmem>>, vector<128x128xf32>
    %cst_70 = arith.constant dense<0.000000e+00> : vector<2x128xf32>
    %80 = tpu.matmul %78, %79, %cst_70 {dimension_numbers = #tpu.dot_dimension_numbers<[1], [0], [0], [1], [0, 0, 1, 1], [], []>} : vector<2x128xf32>, vector<128x128xf32>, vector<2x128xf32> -> vector<2x128xf32>
    %c0_71 = arith.constant 0 : index
    %c0_72 = arith.constant 0 : index
    %81 = vector.load %arg7[%c0_71, %c0_72] : memref<1x128xf32, #tpu.memory_space<vmem>>, vector<1x128xf32>
    %82 = vector.broadcast %81 : vector<1x128xf32> to vector<2x128xf32>
    %83 = arith.addf %80, %82 : vector<2x128xf32>
    %cst_73 = arith.constant 3.906250e-03 : f32
    %84 = vector.broadcast %cst_73 : f32 to vector<2x128xf32>
    %85 = arith.mulf %83, %84 : vector<2x128xf32>
    %86 = math.roundeven %85 : vector<2x128xf32>
    %cst_74 = arith.constant 3.906250e-03 : f32
    %87 = vector.broadcast %cst_74 : f32 to vector<2x128xf32>
    %88 = arith.mulf %86, %87 : vector<2x128xf32>
    %c0_75 = arith.constant 0 : index
    %c0_76 = arith.constant 0 : index
    %89 = vector.load %arg8[%c0_75, %c0_76] : memref<2x128xf32, #tpu.memory_space<vmem>>, vector<2x128xf32>
    tpu.vector_store %arg8[%c0_75, %c0_76], %88 {strides = array<i32>} : memref<2x128xf32, #tpu.memory_space<vmem>>, vector<2x128xf32>,
    return
  }
  func.func @transform_0(%arg0: i32) -> (i32, i32) {
    %c0_i32 = arith.constant 0 : i32
    %c0_i32_0 = arith.constant 0 : i32
    return %c0_i32, %arg0 : i32, i32
  }
  func.func @transform_1(%arg0: i32) -> (i32, i32) {
    %c0_i32 = arith.constant 0 : i32
    %c0_i32_0 = arith.constant 0 : i32
    %c0_i32_1 = arith.constant 0 : i32
    return %c0_i32, %c0_i32_0 : i32, i32
  }
  func.func @transform_2(%arg0: i32) -> (i32, i32) {
    %c0_i32 = arith.constant 0 : i32
    %c0_i32_0 = arith.constant 0 : i32
    %c0_i32_1 = arith.constant 0 : i32
    return %c0_i32, %c0_i32_0 : i32, i32
  }
  func.func @transform_3(%arg0: i32) -> (i32, i32, i32) {
    %c0_i32 = arith.constant 0 : i32
    %c0_i32_0 = arith.constant 0 : i32
    %c0_i32_1 = arith.constant 0 : i32
    %c0_i32_2 = arith.constant 0 : i32
    return %c0_i32, %c0_i32_0, %c0_i32_1 : i32, i32, i32
  }
  func.func @transform_4(%arg0: i32) -> (i32, i32) {
    %c0_i32 = arith.constant 0 : i32
    %c0_i32_0 = arith.constant 0 : i32
    %c0_i32_1 = arith.constant 0 : i32
    return %c0_i32, %c0_i32_0 : i32, i32
  }
  func.func @transform_5(%arg0: i32) -> (i32, i32) {
    %c0_i32 = arith.constant 0 : i32
    %c0_i32_0 = arith.constant 0 : i32
    %c0_i32_1 = arith.constant 0 : i32
    return %c0_i32, %c0_i32_0 : i32, i32
  }
  func.func @transform_6(%arg0: i32) -> (i32, i32) {
    %c0_i32 = arith.constant 0 : i32
    %c0_i32_0 = arith.constant 0 : i32
    %c0_i32_1 = arith.constant 0 : i32
    return %c0_i32, %c0_i32_0 : i32, i32
  }
  func.func @transform_7(%arg0: i32) -> (i32, i32) {
    %c0_i32 = arith.constant 0 : i32
    %c0_i32_0 = arith.constant 0 : i32
    return %arg0, %c0_i32 : i32, i32
  }
}

</mosaic_0001>

<llo_original>
// kernel: quantized_net_forward.1
$region0: #{quantized_net_forward.1}
  #allocation0 [shape = 'u32[]', space=smem, size = 0x4, offset = 0x4, fixed_abs, tag = 'smem constant byte address 0x4 - core index']
  #allocation1 [shape = 'u32[72,128]{1,0:T(1,128)}', space=vmem, size = 0x9000, scoped, tag = 'internal scratch']
  #allocation2 [shape = 'f32[2,8,256]{2,1,0:T(8,128)}', space=vmem, size = 0x4000, scoped, tag = 'scratch operand']
  %s0 = inlined_call_operand.vmem [shape: f32[36,512], index: 0, kind: input, shape index: {}]
  %s1 = inlined_call_operand.vmem [shape: f32[8,36], index: 1, kind: input, shape index: {}]
  %s2 = inlined_call_operand.vmem [shape: f32[8,1], index: 2, kind: input, shape index: {}]
  %s3 = inlined_call_operand.vmem [shape: f32[8,256,128], index: 3, kind: input, shape index: {}]
  %s4 = inlined_call_operand.vmem [shape: f32[1,128], index: 4, kind: input, shape index: {}]
  %s5 = inlined_call_operand.vmem [shape: f32[128,128], index: 5, kind: input, shape index: {}]
  %s6 = inlined_call_operand.vmem [shape: f32[1,128], index: 6, kind: input, shape index: {}]
  %s7 = inlined_call_operand.hbm [shape: f32[2,128], index: 7, kind: output, shape index: {}]
  %s8 = sld [smem:[#allocation0]]
  $region38: #{quantized_net_forward.1} parent=0
    _
  %s10 = ssub.s32 1, %s8
  %s11 = scalar_select 0, %s10, %s8
  $region1: #{quantized_net_forward.1} parent=0
    #allocation3 [shape = 'u8[1024]{0}', space=vmem, size = 0x400, scoped, tag = 'output window, operand 0, single buffered']
    #allocation4 [shape = 's32[1]{0}', space=sflag, size = 0x4, scoped, tag = 'scoped memory for quantized_net_forward.1']
    %12 = vsyncpa [#allocation4], 0
    // Predicated region
    $region2: #{quantized_net_forward.1} parent=1 // pred_check
      _
    $region3: #{quantized_net_forward.1} parent=1 // pred_check_branch
      %14 = sbr.rel (0) target = $region5
    $region4: #{quantized_net_forward.1} parent=1 // pred_region
      _
    $region5: #{quantized_net_forward.1} parent=1 // pred_fallthru
      _
    // Predicated region
    $region6: #{quantized_net_forward.1} parent=1 // pred_check
      _
    $region7: #{quantized_net_forward.1} parent=1 // pred_check_branch
      %16 = sbr.rel (0) target = $region9
    $region8: #{quantized_net_forward.1} parent=1 // pred_region
      _
    $region9: #{quantized_net_forward.1} parent=1 // pred_fallthru
      _
    // Predicated region
    $region10: #{quantized_net_forward.1} parent=1 // pred_check
      _
    $region11: #{quantized_net_forward.1} parent=1 // pred_check_branch
      %18 = sbr.rel (0) target = $region13
    $region12: #{quantized_net_forward.1} parent=1 // pred_region
      _
    $region13: #{quantized_net_forward.1} parent=1 // pred_fallthru
      _
    // Predicated region
    $region14: #{quantized_net_forward.1} parent=1 // pred_check
      _
    $region15: #{quantized_net_forward.1} parent=1 // pred_check_branch
      %20 = sbr.rel (0) target = $region17
    $region16: #{quantized_net_forward.1} parent=1 // pred_region
      _
    $region17: #{quantized_net_forward.1} parent=1 // pred_fallthru
      _
    // Predicated region
    $region18: #{quantized_net_forward.1} parent=1 // pred_check
      _
    $region19: #{quantized_net_forward.1} parent=1 // pred_check_branch
      %22 = sbr.rel (0) target = $region21
    $region20: #{quantized_net_forward.1} parent=1 // pred_region
      _
    $region21: #{quantized_net_forward.1} parent=1 // pred_fallthru
      _
    // Predicated region
    $region22: #{quantized_net_forward.1} parent=1 // pred_check
      _
    $region23: #{quantized_net_forward.1} parent=1 // pred_check_branch
      %24 = sbr.rel (0) target = $region25
    $region24: #{quantized_net_forward.1} parent=1 // pred_region
      _
    $region25: #{quantized_net_forward.1} parent=1 // pred_fallthru
      _
    // Predicated region
    $region26: #{quantized_net_forward.1} parent=1 // pred_check
      _
    $region27: #{quantized_net_forward.1} parent=1 // pred_check_branch
      %26 = sbr.rel (0) target = $region29
    $region28: #{quantized_net_forward.1} parent=1 // pred_region
      _
    $region29: #{quantized_net_forward.1} parent=1 // pred_fallthru
      _
    %v27 = vld [vmem:[%s0] sm:$0xff]
    %v28 = vld [vmem:[%s0 + $0x8] sm:$0xff]
    %v29 = vld [vmem:[%s0 + $0x10] sm:$0xff]
    %v30 = vld [vmem:[%s0 + $0x18] sm:$0xff]
    %v31 = vld [vmem:[%s0 + $0x20] sm:$0xff]
    %v32 = vld [vmem:[%s0 + $0x28] sm:$0xff]
    %v33 = vld [vmem:[%s0 + $0x30] sm:$0xff]
    %v34 = vld [vmem:[%s0 + $0x38] sm:$0xff]
    %v35 = vld [vmem:[%s0 + $0x40] sm:$0xff]
    %v36 = vld [vmem:[%s0 + $0x48] sm:$0xff]
    %v37 = vld [vmem:[%s0 + $0x50] sm:$0xff]
    %v38 = vld [vmem:[%s0 + $0x58] sm:$0xff]
    %v39 = vld [vmem:[%s0 + $0x60] sm:$0xff]
    %v40 = vld [vmem:[%s0 + $0x68] sm:$0xff]
    %v41 = vld [vmem:[%s0 + $0x70] sm:$0xff]
    %v42 = vld [vmem:[%s0 + $0x78] sm:$0xff]
    %v43 = vld [vmem:[%s0 + $0x80] sm:$0xf]
    %v44 = vld [vmem:[%s0 + $0x88] sm:$0xf]
    %v45 = vld [vmem:[%s0 + $0x90] sm:$0xf]
    %v46 = vld [vmem:[%s0 + $0x98] sm:$0xf]
    %v47 = vmul.f32 %v27, 256.0
    %v48 = vmul.f32 %v28, 256.0
    %v49 = vmul.f32 %v29, 256.0
    %v50 = vmul.f32 %v30, 256.0
    %v51 = vmul.f32 %v31, 256.0
    %v52 = vmul.f32 %v32, 256.0
    %v53 = vmul.f32 %v33, 256.0
    %v54 = vmul.f32 %v34, 256.0
    %v55 = vmul.f32 %v35, 256.0
    %v56 = vmul.f32 %v36, 256.0
    %v57 = vmul.f32 %v37, 256.0
    %v58 = vmul.f32 %v38, 256.0
    %v59 = vmul.f32 %v39, 256.0
    %v60 = vmul.f32 %v40, 256.0
    %v61 = vmul.f32 %v41, 256.0
    %v62 = vmul.f32 %v42, 256.0
    %v63 = vmul.f32 %v43, 256.0
    %v64 = vmul.f32 %v44, 256.0
    %v65 = vmul.f32 %v45, 256.0
    %v66 = vmul.f32 %v46, 256.0
    %v67 = vround.ne.pseudo %v47
    %v68 = vround.ne.pseudo %v48
    %v69 = vround.ne.pseudo %v49
    %v70 = vround.ne.pseudo %v50
    %v71 = vround.ne.pseudo %v51
    %v72 = vround.ne.pseudo %v52
    %v73 = vround.ne.pseudo %v53
    %v74 = vround.ne.pseudo %v54
    %v75 = vround.ne.pseudo %v55
    %v76 = vround.ne.pseudo %v56
    %v77 = vround.ne.pseudo %v57
    %v78 = vround.ne.pseudo %v58
    %v79 = vround.ne.pseudo %v59
    %v80 = vround.ne.pseudo %v60
    %v81 = vround.ne.pseudo %v61
    %v82 = vround.ne.pseudo %v62
    %v83 = vround.ne.pseudo %v63
    %v84 = vround.ne.pseudo %v64
    %v85 = vround.ne.pseudo %v65
    %v86 = vround.ne.pseudo %v66
    %v87 = vld [vmem:[%s1] sm:$0xff]
    %v88 = vld [vmem:[%s2] sm:$0xff]
    %90 = vset.pattern.permute.xlu0 0
    %91 = vperm.xlu0 %90, %v88
    %v92 = vpop.permute.xlu0 %91
    %vm94 = vcmask 293888
    %v96 = vsel %vm94, %v87, 0
    %vm98 = vcmask 1043456
    %v100 = vsel %vm98, %v83, 0
    %v103 = vsel %vm98, %v84, 0
    %v106 = vsel %vm98, %v85, 0
    %v109 = vsel %vm98, %v86, 0
    %111 = vmatpush.msra.mxu0 0.0
    %112 = vmatpush.msra.mxu0 0.0
    %113 = vmatpush.msra.mxu0 0.0
    %114 = vmatpush.msra.mxu0 0.0
    %115 = vmatpush.msra.mxu0 0.0
    %116 = vmatpush.msra.mxu0 0.0
    %117 = vmatpush.msra.mxu0 0.0
    %118 = vmatpush.msra.mxu0 0.0
    %119 = vmatpush.msra.mxu0 0.0
    %120 = vmatpush.msra.mxu0 0.0
    %121 = vmatpush.msra.mxu0 0.0
    %122 = vmatpush.msra.mxu0 %v100
    %123 = vmatpush.msra.mxu0 %v79
    %124 = vmatpush.msra.mxu0 %v75
    %125 = vmatpush.msra.mxu0 %v71
    %126 = vmatpush.msra.mxu0 %v67
    %127 = vmatmul.f32.gmra.mxu0 %v96
    %v128 = vpop.f32.mrf.mxu0
    %v129 = vadd.f32 %v92, %v128
    %130 = vdwg.mxu0
    %131 = vmatpush.msra.mxu0 0.0
    %132 = vmatpush.msra.mxu0 0.0
    %133 = vmatpush.msra.mxu0 0.0
    %134 = vmatpush.msra.mxu0 0.0
    %135 = vmatpush.msra.mxu0 0.0
    %136 = vmatpush.msra.mxu0 0.0
    %137 = vmatpush.msra.mxu0 0.0
    %138 = vmatpush.msra.mxu0 0.0
    %139 = vmatpush.msra.mxu0 0.0
    %140 = vmatpush.msra.mxu0 0.0
    %141 = vmatpush.msra.mxu0 0.0
    %142 = vmatpush.msra.mxu0 %v103
    %143 = vmatpush.msra.mxu0 %v80
    %144 = vmatpush.msra.mxu0 %v76
    %145 = vmatpush.msra.mxu0 %v72
    %146 = vmatpush.msra.mxu0 %v68
    %147 = vmatmul.f32.gmra.mxu0 %v96
    %v148 = vpop.f32.mrf.mxu0
    %v149 = vadd.f32 %v92, %v148
    %150 = vdwg.mxu0
    %151 = vmatpush.msra.mxu0 0.0
    %152 = vmatpush.msra.mxu0 0.0
    %153 = vmatpush.msra.mxu0 0.0
    %154 = vmatpush.msra.mxu0 0.0
    %155 = vmatpush.msra.mxu0 0.0
    %156 = vmatpush.msra.mxu0 0.0
    %157 = vmatpush.msra.mxu0 0.0
    %158 = vmatpush.msra.mxu0 0.0
    %159 = vmatpush.msra.mxu0 0.0
    %160 = vmatpush.msra.mxu0 0.0
    %161 = vmatpush.msra.mxu0 0.0
    %162 = vmatpush.msra.mxu0 %v106
    %163 = vmatpush.msra.mxu0 %v81
    %164 = vmatpush.msra.mxu0 %v77
    %165 = vmatpush.msra.mxu0 %v73
    %166 = vmatpush.msra.mxu0 %v69
    %167 = vmatmul.f32.gmra.mxu0 %v96
    %v168 = vpop.f32.mrf.mxu0
    %v169 = vadd.f32 %v92, %v168
    %170 = vdwg.mxu0
    %171 = vmatpush.msra.mxu0 0.0
    %172 = vmatpush.msra.mxu0 0.0
    %173 = vmatpush.msra.mxu0 0.0
    %174 = vmatpush.msra.mxu0 0.0
    %175 = vmatpush.msra.mxu0 0.0
    %176 = vmatpush.msra.mxu0 0.0
    %177 = vmatpush.msra.mxu0 0.0
    %178 = vmatpush.msra.mxu0 0.0
    %179 = vmatpush.msra.mxu0 0.0
    %180 = vmatpush.msra.mxu0 0.0
    %181 = vmatpush.msra.mxu0 0.0
    %182 = vmatpush.msra.mxu0 %v109
    %183 = vmatpush.msra.mxu0 %v82
    %184 = vmatpush.msra.mxu0 %v78
    %185 = vmatpush.msra.mxu0 %v74
    %186 = vmatpush.msra.mxu0 %v70
    %187 = vmatmul.f32.gmra.mxu0 %v96
    %v188 = vpop.f32.mrf.mxu0
    %v189 = vadd.f32 %v92, %v188
    %190 = vdwg.mxu0
    %v191 = vmul.f32 %v129, 0.00390625
    %v192 = vmul.f32 %v149, 0.00390625
    %v193 = vmul.f32 %v169, 0.00390625
    %v194 = vmul.f32 %v189, 0.00390625
    %v195 = vround.ne.pseudo %v191
    %v196 = vround.ne.pseudo %v192
    %v197 = vround.ne.pseudo %v193
    %v198 = vround.ne.pseudo %v194
    %v199 = vmax.f32 %v195, 0.0
    %v200 = vmax.f32 %v196, 0.0
    %v201 = vmax.f32 %v197, 0.0
    %v202 = vmax.f32 %v198, 0.0
    %203 = vst [vmem:[#allocation2] sm:$0xff] %v199
    %204 = vst [vmem:[#allocation2 + $0x8] sm:$0xff] %v200
    %s205 = scalar_lea.vmem [#allocation2], 16
    %206 = vst [vmem:[%s205] sm:$0xff] %v201
    %207 = vst [vmem:[%s205 + $0x8] sm:$0xff] %v202
    %v208 = vld [vmem:[#allocation2] ss:$8 sm:$0x3]
    %s209 = scalar_lea.vmem [#allocation2], 16
    %v210 = vld [vmem:[%s209] ss:$8 sm:$0x3]
    %v211 = vld [vmem:[%s3] sm:$0xff]
    %v212 = vld [vmem:[%s3 + $0x8] sm:$0xff]
    %v213 = vld [vmem:[%s3 + $0x10] sm:$0xff]
    %v214 = vld [vmem:[%s3 + $0x18] sm:$0xff]
    %v215 = vld [vmem:[%s3 + $0x20] sm:$0xff]
    %v216 = vld [vmem:[%s3 + $0x28] sm:$0xff]
    %v217 = vld [vmem:[%s3 + $0x30] sm:$0xff]
    %v218 = vld [vmem:[%s3 + $0x38] sm:$0xff]
    %v219 = vld [vmem:[%s3 + $0x40] sm:$0xff]
    %v220 = vld [vmem:[%s3 + $0x48] sm:$0xff]
    %v221 = vld [vmem:[%s3 + $0x50] sm:$0xff]
    %v222 = vld [vmem:[%s3 + $0x58] sm:$0xff]
    %v223 = vld [vmem:[%s3 + $0x60] sm:$0xff]
    %v224 = vld [vmem:[%s3 + $0x68] sm:$0xff]
    %v225 = vld [vmem:[%s3 + $0x70] sm:$0xff]
    %v226 = vld [vmem:[%s3 + $0x78] sm:$0xff]
    %v227 = vld [vmem:[%s3 + $0x80] sm:$0xff]
    %v228 = vld [vmem:[%s3 + $0x88] sm:$0xff]
    %v229 = vld [vmem:[%s3 + $0x90] sm:$0xff]
    %v230 = vld [vmem:[%s3 + $0x98] sm:$0xff]
    %v231 = vld [vmem:[%s3 + $0xa0] sm:$0xff]
    %v232 = vld [vmem:[%s3 + $0xa8] sm:$0xff]
    %v233 = vld [vmem:[%s3 + $0xb0] sm:$0xff]
    %v234 = vld [vmem:[%s3 + $0xb8] sm:$0xff]
    %v235 = vld [vmem:[%s3 + $0xc0] sm:$0xff]
    %v236 = vld [vmem:[%s3 + $0xc8] sm:$0xff]
    %v237 = vld [vmem:[%s3 + $0xd0] sm:$0xff]
    %v238 = vld [vmem:[%s3 + $0xd8] sm:$0xff]
    %v239 = vld [vmem:[%s3 + $0xe0] sm:$0xff]
    %v240 = vld [vmem:[%s3 + $0xe8] sm:$0xff]
    %v241 = vld [vmem:[%s3 + $0xf0] sm:$0xff]
    %v242 = vld [vmem:[%s3 + $0xf8] sm:$0xff]
    %s243 = scalar_lea.vmem [#allocation2], 1
    %v244 = vld [vmem:[%s243] ss:$8 sm:$0x3]
    %s245 = scalar_lea.vmem [#allocation2], 17
    %v246 = vld [vmem:[%s245] ss:$8 sm:$0x3]
    %s247 = scalar_lea.vmem %s3, 256
    %v248 = vld [vmem:[%s247] sm:$0xff]
    %v249 = vld [vmem:[%s247 + $0x8] sm:$0xff]
    %v250 = vld [vmem:[%s247 + $0x10] sm:$0xff]
    %v251 = vld [vmem:[%s247 + $0x18] sm:$0xff]
    %v252 = vld [vmem:[%s247 + $0x20] sm:$0xff]
    %v253 = vld [vmem:[%s247 + $0x28] sm:$0xff]
    %v254 = vld [vmem:[%s247 + $0x30] sm:$0xff]
    %v255 = vld [vmem:[%s247 + $0x38] sm:$0xff]
    %v256 = vld [vmem:[%s247 + $0x40] sm:$0xff]
    %v257 = vld [vmem:[%s247 + $0x48] sm:$0xff]
    %v258 = vld [vmem:[%s247 + $0x50] sm:$0xff]
    %v259 = vld [vmem:[%s247 + $0x58] sm:$0xff]
    %v260 = vld [vmem:[%s247 + $0x60] sm:$0xff]
    %v261 = vld [vmem:[%s247 + $0x68] sm:$0xff]
    %v262 = vld [vmem:[%s247 + $0x70] sm:$0xff]
    %v263 = vld [vmem:[%s247 + $0x78] sm:$0xff]
    %v264 = vld [vmem:[%s247 + $0x80] sm:$0xff]
    %v265 = vld [vmem:[%s247 + $0x88] sm:$0xff]
    %v266 = vld [vmem:[%s247 + $0x90] sm:$0xff]
    %v267 = vld [vmem:[%s247 + $0x98] sm:$0xff]
    %v268 = vld [vmem:[%s247 + $0xa0] sm:$0xff]
    %v269 = vld [vmem:[%s247 + $0xa8] sm:$0xff]
    %v270 = vld [vmem:[%s247 + $0xb0] sm:$0xff]
    %v271 = vld [vmem:[%s247 + $0xb8] sm:$0xff]
    %v272 = vld [vmem:[%s247 + $0xc0] sm:$0xff]
    %v273 = vld [vmem:[%s247 + $0xc8] sm:$0xff]
    %v274 = vld [vmem:[%s247 + $0xd0] sm:$0xff]
    %v275 = vld [vmem:[%s247 + $0xd8] sm:$0xff]
    %v276 = vld [vmem:[%s247 + $0xe0] sm:$0xff]
    %v277 = vld [vmem:[%s247 + $0xe8] sm:$0xff]
    %v278 = vld [vmem:[%s247 + $0xf0] sm:$0xff]
    %v279 = vld [vmem:[%s247 + $0xf8] sm:$0xff]
    %282 = vst [vmem:[#allocation1] ss:$9 sm:$0xff] %v244
    %s283 = scalar_lea.vmem [#allocation1], 1
    %284 = vst [vmem:[%s283] ss:$9 sm:$0xff] %v246
    %v285 = vld [vmem:[#allocation1] sm:$0xff]
    %v286 = vld [vmem:[#allocation1 + $0x9] sm:$0xff]
    %289 = vmatpush.msra.mxu0 %v263
    %290 = vmatpush.msra.mxu0 %v262
    %291 = vmatpush.msra.mxu0 %v261
    %292 = vmatpush.msra.mxu0 %v260
    %293 = vmatpush.msra.mxu0 %v259
    %294 = vmatpush.msra.mxu0 %v258
    %295 = vmatpush.msra.mxu0 %v257
    %296 = vmatpush.msra.mxu0 %v256
    %297 = vmatpush.msra.mxu0 %v255
    %298 = vmatpush.msra.mxu0 %v254
    %299 = vmatpush.msra.mxu0 %v253
    %300 = vmatpush.msra.mxu0 %v252
    %301 = vmatpush.msra.mxu0 %v251
    %302 = vmatpush.msra.mxu0 %v250
    %303 = vmatpush.msra.mxu0 %v249
    %304 = vmatpush.msra.mxu0 %v248
    %305 = vmatmul.f32.gmra.mxu0 %v285
    %v306 = vpop.f32.mrf.mxu0
    %v307 = vadd.f32 0.0, %v306
    %308 = vdwg.mxu0
    %309 = vmatpush.msra.mxu0 %v279
    %310 = vmatpush.msra.mxu0 %v278
    %311 = vmatpush.msra.mxu0 %v277
    %312 = vmatpush.msra.mxu0 %v276
    %313 = vmatpush.msra.mxu0 %v275
    %314 = vmatpush.msra.mxu0 %v274
    %315 = vmatpush.msra.mxu0 %v273
    %316 = vmatpush.msra.mxu0 %v272
    %317 = vmatpush.msra.mxu0 %v271
    %318 = vmatpush.msra.mxu0 %v270
    %319 = vmatpush.msra.mxu0 %v269
    %320 = vmatpush.msra.mxu0 %v268
    %321 = vmatpush.msra.mxu0 %v267
    %322 = vmatpush.msra.mxu0 %v266
    %323 = vmatpush.msra.mxu0 %v265
    %324 = vmatpush.msra.mxu0 %v264
    %325 = vmatmul.f32.gmra.mxu0 %v286
    %v326 = vpop.f32.mrf.mxu0
    %v327 = vadd.f32 %v307, %v326
    %328 = vdwg.mxu0
    %331 = vst [vmem:[#allocation1] ss:$9 sm:$0xff] %v208
    %s332 = scalar_lea.vmem [#allocation1], 1
    %333 = vst [vmem:[%s332] ss:$9 sm:$0xff] %v210
    %v334 = vld [vmem:[#allocation1] sm:$0xff]
    %v335 = vld [vmem:[#allocation1 + $0x9] sm:$0xff]
    %338 = vmatpush.msra.mxu0 %v226
    %339 = vmatpush.msra.mxu0 %v225
    %340 = vmatpush.msra.mxu0 %v224
    %341 = vmatpush.msra.mxu0 %v223
    %342 = vmatpush.msra.mxu0 %v222
    %343 = vmatpush.msra.mxu0 %v221
    %344 = vmatpush.msra.mxu0 %v220
    %345 = vmatpush.msra.mxu0 %v219
    %346 = vmatpush.msra.mxu0 %v218
    %347 = vmatpush.msra.mxu0 %v217
    %348 = vmatpush.msra.mxu0 %v216
    %349 = vmatpush.msra.mxu0 %v215
    %350 = vmatpush.msra.mxu0 %v214
    %351 = vmatpush.msra.mxu0 %v213
    %352 = vmatpush.msra.mxu0 %v212
    %353 = vmatpush.msra.mxu0 %v211
    %354 = vmatmul.f32.gmra.mxu0 %v334
    %v355 = vpop.f32.mrf.mxu0
    %v356 = vadd.f32 %v327, %v355
    %357 = vdwg.mxu0
    %358 = vmatpush.msra.mxu0 %v242
    %359 = vmatpush.msra.mxu0 %v241
    %360 = vmatpush.msra.mxu0 %v240
    %361 = vmatpush.msra.mxu0 %v239
    %362 = vmatpush.msra.mxu0 %v238
    %363 = vmatpush.msra.mxu0 %v237
    %364 = vmatpush.msra.mxu0 %v236
    %365 = vmatpush.msra.mxu0 %v235
    %366 = vmatpush.msra.mxu0 %v234
    %367 = vmatpush.msra.mxu0 %v233
    %368 = vmatpush.msra.mxu0 %v232
    %369 = vmatpush.msra.mxu0 %v231
    %370 = vmatpush.msra.mxu0 %v230
    %371 = vmatpush.msra.mxu0 %v229
    %372 = vmatpush.msra.mxu0 %v228
    %373 = vmatpush.msra.mxu0 %v227
    %374 = vmatmul.f32.gmra.mxu0 %v335
    %v375 = vpop.f32.mrf.mxu0
    %v376 = vadd.f32 %v356, %v375
    %377 = vdwg.mxu0
    %s378 = scalar_lea.vmem [#allocation2], 2
    %v379 = vld [vmem:[%s378] ss:$8 sm:$0x3]
    %s380 = scalar_lea.vmem [#allocation2], 18
    %v381 = vld [vmem:[%s380] ss:$8 sm:$0x3]
    %s382 = scalar_lea.vmem %s3, 512
    %v383 = vld [vmem:[%s382] sm:$0xff]
    %v384 = vld [vmem:[%s382 + $0x8] sm:$0xff]
    %v385 = vld [vmem:[%s382 + $0x10] sm:$0xff]
    %v386 = vld [vmem:[%s382 + $0x18] sm:$0xff]
    %v387 = vld [vmem:[%s382 + $0x20] sm:$0xff]
    %v388 = vld [vmem:[%s382 + $0x28] sm:$0xff]
    %v389 = vld [vmem:[%s382 + $0x30] sm:$0xff]
    %v390 = vld [vmem:[%s382 + $0x38] sm:$0xff]
    %v391 = vld [vmem:[%s382 + $0x40] sm:$0xff]
    %v392 = vld [vmem:[%s382 + $0x48] sm:$0xff]
    %v393 = vld [vmem:[%s382 + $0x50] sm:$0xff]
    %v394 = vld [vmem:[%s382 + $0x58] sm:$0xff]
    %v395 = vld [vmem:[%s382 + $0x60] sm:$0xff]
    %v396 = vld [vmem:[%s382 + $0x68] sm:$0xff]
    %v397 = vld [vmem:[%s382 + $0x70] sm:$0xff]
    %v398 = vld [vmem:[%s382 + $0x78] sm:$0xff]
    %v399 = vld [vmem:[%s382 + $0x80] sm:$0xff]
    %v400 = vld [vmem:[%s382 + $0x88] sm:$0xff]
    %v401 = vld [vmem:[%s382 + $0x90] sm:$0xff]
    %v402 = vld [vmem:[%s382 + $0x98] sm:$0xff]
    %v403 = vld [vmem:[%s382 + $0xa0] sm:$0xff]
    %v404 = vld [vmem:[%s382 + $0xa8] sm:$0xff]
    %v405 = vld [vmem:[%s382 + $0xb0] sm:$0xff]
    %v406 = vld [vmem:[%s382 + $0xb8] sm:$0xff]
    %v407 = vld [vmem:[%s382 + $0xc0] sm:$0xff]
    %v408 = vld [vmem:[%s382 + $0xc8] sm:$0xff]
    %v409 = vld [vmem:[%s382 + $0xd0] sm:$0xff]
    %v410 = vld [vmem:[%s382 + $0xd8] sm:$0xff]
    %v411 = vld [vmem:[%s382 + $0xe0] sm:$0xff]
    %v412 = vld [vmem:[%s382 + $0xe8] sm:$0xff]
    %v413 = vld [vmem:[%s382 + $0xf0] sm:$0xff]
    %v414 = vld [vmem:[%s382 + $0xf8] sm:$0xff]
    %417 = vst [vmem:[#allocation1] ss:$9 sm:$0xff] %v379
    %s418 = scalar_lea.vmem [#allocation1], 1
    %419 = vst [vmem:[%s418] ss:$9 sm:$0xff] %v381
    %v420 = vld [vmem:[#allocation1] sm:$0xff]
    %v421 = vld [vmem:[#allocation1 + $0x9] sm:$0xff]
    %424 = vmatpush.msra.mxu0 %v398
    %425 = vmatpush.msra.mxu0 %v397
    %426 = vmatpush.msra.mxu0 %v396
    %427 = vmatpush.msra.mxu0 %v395
    %428 = vmatpush.msra.mxu0 %v394
    %429 = vmatpush.msra.mxu0 %v393
    %430 = vmatpush.msra.mxu0 %v392
    %431 = vmatpush.msra.mxu0 %v391
    %432 = vmatpush.msra.mxu0 %v390
    %433 = vmatpush.msra.mxu0 %v389
    %434 = vmatpush.msra.mxu0 %v388
    %435 = vmatpush.msra.mxu0 %v387
    %436 = vmatpush.msra.mxu0 %v386
    %437 = vmatpush.msra.mxu0 %v385
    %438 = vmatpush.msra.mxu0 %v384
    %439 = vmatpush.msra.mxu0 %v383
    %440 = vmatmul.f32.gmra.mxu0 %v420
    %v441 = vpop.f32.mrf.mxu0
    %v442 = vadd.f32 0.0, %v441
    %443 = vdwg.mxu0
    %444 = vmatpush.msra.mxu0 %v414
    %445 = vmatpush.msra.mxu0 %v413
    %446 = vmatpush.msra.mxu0 %v412
    %447 = vmatpush.msra.mxu0 %v411
    %448 = vmatpush.msra.mxu0 %v410
    %449 = vmatpush.msra.mxu0 %v409
    %450 = vmatpush.msra.mxu0 %v408
    %451 = vmatpush.msra.mxu0 %v407
    %452 = vmatpush.msra.mxu0 %v406
    %453 = vmatpush.msra.mxu0 %v405
    %454 = vmatpush.msra.mxu0 %v404
    %455 = vmatpush.msra.mxu0 %v403
    %456 = vmatpush.msra.mxu0 %v402
    %457 = vmatpush.msra.mxu0 %v401
    %458 = vmatpush.msra.mxu0 %v400
    %459 = vmatpush.msra.mxu0 %v399
    %460 = vmatmul.f32.gmra.mxu0 %v421
    %v461 = vpop.f32.mrf.mxu0
    %v462 = vadd.f32 %v442, %v461
    %463 = vdwg.mxu0
    %v464 = vadd.f32 %v376, %v462
    %s465 = scalar_lea.vmem [#allocation2], 3
    %v466 = vld [vmem:[%s465] ss:$8 sm:$0x3]
    %s467 = scalar_lea.vmem [#allocation2], 19
    %v468 = vld [vmem:[%s467] ss:$8 sm:$0x3]
    %s469 = scalar_lea.vmem %s3, 768
    %v470 = vld [vmem:[%s469] sm:$0xff]
    %v471 = vld [vmem:[%s469 + $0x8] sm:$0xff]
    %v472 = vld [vmem:[%s469 + $0x10] sm:$0xff]
    %v473 = vld [vmem:[%s469 + $0x18] sm:$0xff]
    %v474 = vld [vmem:[%s469 + $0x20] sm:$0xff]
    %v475 = vld [vmem:[%s469 + $0x28] sm:$0xff]
    %v476 = vld [vmem:[%s469 + $0x30] sm:$0xff]
    %v477 = vld [vmem:[%s469 + $0x38] sm:$0xff]
    %v478 = vld [vmem:[%s469 + $0x40] sm:$0xff]
    %v479 = vld [vmem:[%s469 + $0x48] sm:$0xff]
    %v480 = vld [vmem:[%s469 + $0x50] sm:$0xff]
    %v481 = vld [vmem:[%s469 + $0x58] sm:$0xff]
    %v482 = vld [vmem:[%s469 + $0x60] sm:$0xff]
    %v483 = vld [vmem:[%s469 + $0x68] sm:$0xff]
    %v484 = vld [vmem:[%s469 + $0x70] sm:$0xff]
    %v485 = vld [vmem:[%s469 + $0x78] sm:$0xff]
    %v486 = vld [vmem:[%s469 + $0x80] sm:$0xff]
    %v487 = vld [vmem:[%s469 + $0x88] sm:$0xff]
    %v488 = vld [vmem:[%s469 + $0x90] sm:$0xff]
    %v489 = vld [vmem:[%s469 + $0x98] sm:$0xff]
    %v490 = vld [vmem:[%s469 + $0xa0] sm:$0xff]
    %v491 = vld [vmem:[%s469 + $0xa8] sm:$0xff]
    %v492 = vld [vmem:[%s469 + $0xb0] sm:$0xff]
    %v493 = vld [vmem:[%s469 + $0xb8] sm:$0xff]
    %v494 = vld [vmem:[%s469 + $0xc0] sm:$0xff]
    %v495 = vld [vmem:[%s469 + $0xc8] sm:$0xff]
    %v496 = vld [vmem:[%s469 + $0xd0] sm:$0xff]
    %v497 = vld [vmem:[%s469 + $0xd8] sm:$0xff]
    %v498 = vld [vmem:[%s469 + $0xe0] sm:$0xff]
    %v499 = vld [vmem:[%s469 + $0xe8] sm:$0xff]
    %v500 = vld [vmem:[%s469 + $0xf0] sm:$0xff]
    %v501 = vld [vmem:[%s469 + $0xf8] sm:$0xff]
    %504 = vst [vmem:[#allocation1] ss:$9 sm:$0xff] %v466
    %s505 = scalar_lea.vmem [#allocation1], 1
    %506 = vst [vmem:[%s505] ss:$9 sm:$0xff] %v468
    %v507 = vld [vmem:[#allocation1] sm:$0xff]
    %v508 = vld [vmem:[#allocation1 + $0x9] sm:$0xff]
    %511 = vmatpush.msra.mxu0 %v485
    %512 = vmatpush.msra.mxu0 %v484
    %513 = vmatpush.msra.mxu0 %v483
    %514 = vmatpush.msra.mxu0 %v482
    %515 = vmatpush.msra.mxu0 %v481
    %516 = vmatpush.msra.mxu0 %v480
    %517 = vmatpush.msra.mxu0 %v479
    %518 = vmatpush.msra.mxu0 %v478
    %519 = vmatpush.msra.mxu0 %v477
    %520 = vmatpush.msra.mxu0 %v476
    %521 = vmatpush.msra.mxu0 %v475
    %522 = vmatpush.msra.mxu0 %v474
    %523 = vmatpush.msra.mxu0 %v473
    %524 = vmatpush.msra.mxu0 %v472
    %525 = vmatpush.msra.mxu0 %v471
    %526 = vmatpush.msra.mxu0 %v470
    %527 = vmatmul.f32.gmra.mxu0 %v507
    %v528 = vpop.f32.mrf.mxu0
    %v529 = vadd.f32 0.0, %v528
    %530 = vdwg.mxu0
    %531 = vmatpush.msra.mxu0 %v501
    %532 = vmatpush.msra.mxu0 %v500
    %533 = vmatpush.msra.mxu0 %v499
    %534 = vmatpush.msra.mxu0 %v498
    %535 = vmatpush.msra.mxu0 %v497
    %536 = vmatpush.msra.mxu0 %v496
    %537 = vmatpush.msra.mxu0 %v495
    %538 = vmatpush.msra.mxu0 %v494
    %539 = vmatpush.msra.mxu0 %v493
    %540 = vmatpush.msra.mxu0 %v492
    %541 = vmatpush.msra.mxu0 %v491
    %542 = vmatpush.msra.mxu0 %v490
    %543 = vmatpush.msra.mxu0 %v489
    %544 = vmatpush.msra.mxu0 %v488
    %545 = vmatpush.msra.mxu0 %v487
    %546 = vmatpush.msra.mxu0 %v486
    %547 = vmatmul.f32.gmra.mxu0 %v508
    %v548 = vpop.f32.mrf.mxu0
    %v549 = vadd.f32 %v529, %v548
    %550 = vdwg.mxu0
    %v551 = vadd.f32 %v464, %v549
    %s552 = scalar_lea.vmem [#allocation2], 4
    %v553 = vld [vmem:[%s552] ss:$8 sm:$0x3]
    %s554 = scalar_lea.vmem [#allocation2], 20
    %v555 = vld [vmem:[%s554] ss:$8 sm:$0x3]
    %s556 = scalar_lea.vmem %s3, 1024
    %v557 = vld [vmem:[%s556] sm:$0xff]
    %v558 = vld [vmem:[%s556 + $0x8] sm:$0xff]
    %v559 = vld [vmem:[%s556 + $0x10] sm:$0xff]
    %v560 = vld [vmem:[%s556 + $0x18] sm:$0xff]
    %v561 = vld [vmem:[%s556 + $0x20] sm:$0xff]
    %v562 = vld [vmem:[%s556 + $0x28] sm:$0xff]
    %v563 = vld [vmem:[%s556 + $0x30] sm:$0xff]
    %v564 = vld [vmem:[%s556 + $0x38] sm:$0xff]
    %v565 = vld [vmem:[%s556 + $0x40] sm:$0xff]
    %v566 = vld [vmem:[%s556 + $0x48] sm:$0xff]
    %v567 = vld [vmem:[%s556 + $0x50] sm:$0xff]
    %v568 = vld [vmem:[%s556 + $0x58] sm:$0xff]
    %v569 = vld [vmem:[%s556 + $0x60] sm:$0xff]
    %v570 = vld [vmem:[%s556 + $0x68] sm:$0xff]
    %v571 = vld [vmem:[%s556 + $0x70] sm:$0xff]
    %v572 = vld [vmem:[%s556 + $0x78] sm:$0xff]
    %v573 = vld [vmem:[%s556 + $0x80] sm:$0xff]
    %v574 = vld [vmem:[%s556 + $0x88] sm:$0xff]
    %v575 = vld [vmem:[%s556 + $0x90] sm:$0xff]
    %v576 = vld [vmem:[%s556 + $0x98] sm:$0xff]
    %v577 = vld [vmem:[%s556 + $0xa0] sm:$0xff]
    %v578 = vld [vmem:[%s556 + $0xa8] sm:$0xff]
    %v579 = vld [vmem:[%s556 + $0xb0] sm:$0xff]
    %v580 = vld [vmem:[%s556 + $0xb8] sm:$0xff]
    %v581 = vld [vmem:[%s556 + $0xc0] sm:$0xff]
    %v582 = vld [vmem:[%s556 + $0xc8] sm:$0xff]
    %v583 = vld [vmem:[%s556 + $0xd0] sm:$0xff]
    %v584 = vld [vmem:[%s556 + $0xd8] sm:$0xff]
    %v585 = vld [vmem:[%s556 + $0xe0] sm:$0xff]
    %v586 = vld [vmem:[%s556 + $0xe8] sm:$0xff]
    %v587 = vld [vmem:[%s556 + $0xf0] sm:$0xff]
    %v588 = vld [vmem:[%s556 + $0xf8] sm:$0xff]
    %591 = vst [vmem:[#allocation1] ss:$9 sm:$0xff] %v553
    %s592 = scalar_lea.vmem [#allocation1], 1
    %593 = vst [vmem:[%s592] ss:$9 sm:$0xff] %v555
    %v594 = vld [vmem:[#allocation1] sm:$0xff]
    %v595 = vld [vmem:[#allocation1 + $0x9] sm:$0xff]
    %598 = vmatpush.msra.mxu0 %v572
    %599 = vmatpush.msra.mxu0 %v571
    %600 = vmatpush.msra.mxu0 %v570
    %601 = vmatpush.msra.mxu0 %v569
    %602 = vmatpush.msra.mxu0 %v568
    %603 = vmatpush.msra.mxu0 %v567
    %604 = vmatpush.msra.mxu0 %v566
    %605 = vmatpush.msra.mxu0 %v565
    %606 = vmatpush.msra.mxu0 %v564
    %607 = vmatpush.msra.mxu0 %v563
    %608 = vmatpush.msra.mxu0 %v562
    %609 = vmatpush.msra.mxu0 %v561
    %610 = vmatpush.msra.mxu0 %v560
    %611 = vmatpush.msra.mxu0 %v559
    %612 = vmatpush.msra.mxu0 %v558
    %613 = vmatpush.msra.mxu0 %v557
    %614 = vmatmul.f32.gmra.mxu0 %v594
    %v615 = vpop.f32.mrf.mxu0
    %v616 = vadd.f32 0.0, %v615
    %617 = vdwg.mxu0
    %618 = vmatpush.msra.mxu0 %v588
    %619 = vmatpush.msra.mxu0 %v587
    %620 = vmatpush.msra.mxu0 %v586
    %621 = vmatpush.msra.mxu0 %v585
    %622 = vmatpush.msra.mxu0 %v584
    %623 = vmatpush.msra.mxu0 %v583
    %624 = vmatpush.msra.mxu0 %v582
    %625 = vmatpush.msra.mxu0 %v581
    %626 = vmatpush.msra.mxu0 %v580
    %627 = vmatpush.msra.mxu0 %v579
    %628 = vmatpush.msra.mxu0 %v578
    %629 = vmatpush.msra.mxu0 %v577
    %630 = vmatpush.msra.mxu0 %v576
    %631 = vmatpush.msra.mxu0 %v575
    %632 = vmatpush.msra.mxu0 %v574
    %633 = vmatpush.msra.mxu0 %v573
    %634 = vmatmul.f32.gmra.mxu0 %v595
    %v635 = vpop.f32.mrf.mxu0
    %v636 = vadd.f32 %v616, %v635
    %637 = vdwg.mxu0
    %v638 = vadd.f32 %v551, %v636
    %s639 = scalar_lea.vmem [#allocation2], 5
    %v640 = vld [vmem:[%s639] ss:$8 sm:$0x3]
    %s641 = scalar_lea.vmem [#allocation2], 21
    %v642 = vld [vmem:[%s641] ss:$8 sm:$0x3]
    %s643 = scalar_lea.vmem %s3, 1280
    %v644 = vld [vmem:[%s643] sm:$0xff]
    %v645 = vld [vmem:[%s643 + $0x8] sm:$0xff]
    %v646 = vld [vmem:[%s643 + $0x10] sm:$0xff]
    %v647 = vld [vmem:[%s643 + $0x18] sm:$0xff]
    %v648 = vld [vmem:[%s643 + $0x20] sm:$0xff]
    %v649 = vld [vmem:[%s643 + $0x28] sm:$0xff]
    %v650 = vld [vmem:[%s643 + $0x30] sm:$0xff]
    %v651 = vld [vmem:[%s643 + $0x38] sm:$0xff]
    %v652 = vld [vmem:[%s643 + $0x40] sm:$0xff]
    %v653 = vld [vmem:[%s643 + $0x48] sm:$0xff]
    %v654 = vld [vmem:[%s643 + $0x50] sm:$0xff]
    %v655 = vld [vmem:[%s643 + $0x58] sm:$0xff]
    %v656 = vld [vmem:[%s643 + $0x60] sm:$0xff]
    %v657 = vld [vmem:[%s643 + $0x68] sm:$0xff]
    %v658 = vld [vmem:[%s643 + $0x70] sm:$0xff]
    %v659 = vld [vmem:[%s643 + $0x78] sm:$0xff]
    %v660 = vld [vmem:[%s643 + $0x80] sm:$0xff]
    %v661 = vld [vmem:[%s643 + $0x88] sm:$0xff]
    %v662 = vld [vmem:[%s643 + $0x90] sm:$0xff]
    %v663 = vld [vmem:[%s643 + $0x98] sm:$0xff]
    %v664 = vld [vmem:[%s643 + $0xa0] sm:$0xff]
    %v665 = vld [vmem:[%s643 + $0xa8] sm:$0xff]
    %v666 = vld [vmem:[%s643 + $0xb0] sm:$0xff]
    %v667 = vld [vmem:[%s643 + $0xb8] sm:$0xff]
    %v668 = vld [vmem:[%s643 + $0xc0] sm:$0xff]
    %v669 = vld [vmem:[%s643 + $0xc8] sm:$0xff]
    %v670 = vld [vmem:[%s643 + $0xd0] sm:$0xff]
    %v671 = vld [vmem:[%s643 + $0xd8] sm:$0xff]
    %v672 = vld [vmem:[%s643 + $0xe0] sm:$0xff]
    %v673 = vld [vmem:[%s643 + $0xe8] sm:$0xff]
    %v674 = vld [vmem:[%s643 + $0xf0] sm:$0xff]
    %v675 = vld [vmem:[%s643 + $0xf8] sm:$0xff]
    %678 = vst [vmem:[#allocation1] ss:$9 sm:$0xff] %v640
    %s679 = scalar_lea.vmem [#allocation1], 1
    %680 = vst [vmem:[%s679] ss:$9 sm:$0xff] %v642
    %v681 = vld [vmem:[#allocation1] sm:$0xff]
    %v682 = vld [vmem:[#allocation1 + $0x9] sm:$0xff]
    %685 = vmatpush.msra.mxu0 %v659
    %686 = vmatpush.msra.mxu0 %v658
    %687 = vmatpush.msra.mxu0 %v657
    %688 = vmatpush.msra.mxu0 %v656
    %689 = vmatpush.msra.mxu0 %v655
    %690 = vmatpush.msra.mxu0 %v654
    %691 = vmatpush.msra.mxu0 %v653
    %692 = vmatpush.msra.mxu0 %v652
    %693 = vmatpush.msra.mxu0 %v651
    %694 = vmatpush.msra.mxu0 %v650
    %695 = vmatpush.msra.mxu0 %v649
    %696 = vmatpush.msra.mxu0 %v648
    %697 = vmatpush.msra.mxu0 %v647
    %698 = vmatpush.msra.mxu0 %v646
    %699 = vmatpush.msra.mxu0 %v645
    %700 = vmatpush.msra.mxu0 %v644
    %701 = vmatmul.f32.gmra.mxu0 %v681
    %v702 = vpop.f32.mrf.mxu0
    %v703 = vadd.f32 0.0, %v702
    %704 = vdwg.mxu0
    %705 = vmatpush.msra.mxu0 %v675
    %706 = vmatpush.msra.mxu0 %v674
    %707 = vmatpush.msra.mxu0 %v673
    %708 = vmatpush.msra.mxu0 %v672
    %709 = vmatpush.msra.mxu0 %v671
    %710 = vmatpush.msra.mxu0 %v670
    %711 = vmatpush.msra.mxu0 %v669
    %712 = vmatpush.msra.mxu0 %v668
    %713 = vmatpush.msra.mxu0 %v667
    %714 = vmatpush.msra.mxu0 %v666
    %715 = vmatpush.msra.mxu0 %v665
    %716 = vmatpush.msra.mxu0 %v664
    %717 = vmatpush.msra.mxu0 %v663
    %718 = vmatpush.msra.mxu0 %v662
    %719 = vmatpush.msra.mxu0 %v661
    %720 = vmatpush.msra.mxu0 %v660
    %721 = vmatmul.f32.gmra.mxu0 %v682
    %v722 = vpop.f32.mrf.mxu0
    %v723 = vadd.f32 %v703, %v722
    %724 = vdwg.mxu0
    %v725 = vadd.f32 %v638, %v723
    %s726 = scalar_lea.vmem [#allocation2], 6
    %v727 = vld [vmem:[%s726] ss:$8 sm:$0x3]
    %s728 = scalar_lea.vmem [#allocation2], 22
    %v729 = vld [vmem:[%s728] ss:$8 sm:$0x3]
    %s730 = scalar_lea.vmem %s3, 1536
    %v731 = vld [vmem:[%s730] sm:$0xff]
    %v732 = vld [vmem:[%s730 + $0x8] sm:$0xff]
    %v733 = vld [vmem:[%s730 + $0x10] sm:$0xff]
    %v734 = vld [vmem:[%s730 + $0x18] sm:$0xff]
    %v735 = vld [vmem:[%s730 + $0x20] sm:$0xff]
    %v736 = vld [vmem:[%s730 + $0x28] sm:$0xff]
    %v737 = vld [vmem:[%s730 + $0x30] sm:$0xff]
    %v738 = vld [vmem:[%s730 + $0x38] sm:$0xff]
    %v739 = vld [vmem:[%s730 + $0x40] sm:$0xff]
    %v740 = vld [vmem:[%s730 + $0x48] sm:$0xff]
    %v741 = vld [vmem:[%s730 + $0x50] sm:$0xff]
    %v742 = vld [vmem:[%s730 + $0x58] sm:$0xff]
    %v743 = vld [vmem:[%s730 + $0x60] sm:$0xff]
    %v744 = vld [vmem:[%s730 + $0x68] sm:$0xff]
    %v745 = vld [vmem:[%s730 + $0x70] sm:$0xff]
    %v746 = vld [vmem:[%s730 + $0x78] sm:$0xff]
    %v747 = vld [vmem:[%s730 + $0x80] sm:$0xff]
    %v748 = vld [vmem:[%s730 + $0x88] sm:$0xff]
    %v749 = vld [vmem:[%s730 + $0x90] sm:$0xff]
    %v750 = vld [vmem:[%s730 + $0x98] sm:$0xff]
    %v751 = vld [vmem:[%s730 + $0xa0] sm:$0xff]
    %v752 = vld [vmem:[%s730 + $0xa8] sm:$0xff]
    %v753 = vld [vmem:[%s730 + $0xb0] sm:$0xff]
    %v754 = vld [vmem:[%s730 + $0xb8] sm:$0xff]
    %v755 = vld [vmem:[%s730 + $0xc0] sm:$0xff]
    %v756 = vld [vmem:[%s730 + $0xc8] sm:$0xff]
    %v757 = vld [vmem:[%s730 + $0xd0] sm:$0xff]
    %v758 = vld [vmem:[%s730 + $0xd8] sm:$0xff]
    %v759 = vld [vmem:[%s730 + $0xe0] sm:$0xff]
    %v760 = vld [vmem:[%s730 + $0xe8] sm:$0xff]
    %v761 = vld [vmem:[%s730 + $0xf0] sm:$0xff]
    %v762 = vld [vmem:[%s730 + $0xf8] sm:$0xff]
    %765 = vst [vmem:[#allocation1] ss:$9 sm:$0xff] %v727
    %s766 = scalar_lea.vmem [#allocation1], 1
    %767 = vst [vmem:[%s766] ss:$9 sm:$0xff] %v729
    %v768 = vld [vmem:[#allocation1] sm:$0xff]
    %v769 = vld [vmem:[#allocation1 + $0x9] sm:$0xff]
    %772 = vmatpush.msra.mxu0 %v746
    %773 = vmatpush.msra.mxu0 %v745
    %774 = vmatpush.msra.mxu0 %v744
    %775 = vmatpush.msra.mxu0 %v743
    %776 = vmatpush.msra.mxu0 %v742
    %777 = vmatpush.msra.mxu0 %v741
    %778 = vmatpush.msra.mxu0 %v740
    %779 = vmatpush.msra.mxu0 %v739
    %780 = vmatpush.msra.mxu0 %v738
    %781 = vmatpush.msra.mxu0 %v737
    %782 = vmatpush.msra.mxu0 %v736
    %783 = vmatpush.msra.mxu0 %v735
    %784 = vmatpush.msra.mxu0 %v734
    %785 = vmatpush.msra.mxu0 %v733
    %786 = vmatpush.msra.mxu0 %v732
    %787 = vmatpush.msra.mxu0 %v731
    %788 = vmatmul.f32.gmra.mxu0 %v768
    %v789 = vpop.f32.mrf.mxu0
    %v790 = vadd.f32 0.0, %v789
    %791 = vdwg.mxu0
    %792 = vmatpush.msra.mxu0 %v762
    %793 = vmatpush.msra.mxu0 %v761
    %794 = vmatpush.msra.mxu0 %v760
    %795 = vmatpush.msra.mxu0 %v759
    %796 = vmatpush.msra.mxu0 %v758
    %797 = vmatpush.msra.mxu0 %v757
    %798 = vmatpush.msra.mxu0 %v756
    %799 = vmatpush.msra.mxu0 %v755
    %800 = vmatpush.msra.mxu0 %v754
    %801 = vmatpush.msra.mxu0 %v753
    %802 = vmatpush.msra.mxu0 %v752
    %803 = vmatpush.msra.mxu0 %v751
    %804 = vmatpush.msra.mxu0 %v750
    %805 = vmatpush.msra.mxu0 %v749
    %806 = vmatpush.msra.mxu0 %v748
    %807 = vmatpush.msra.mxu0 %v747
    %808 = vmatmul.f32.gmra.mxu0 %v769
    %v809 = vpop.f32.mrf.mxu0
    %v810 = vadd.f32 %v790, %v809
    %811 = vdwg.mxu0
    %v812 = vadd.f32 %v725, %v810
    %s813 = scalar_lea.vmem [#allocation2], 7
    %v814 = vld [vmem:[%s813] ss:$8 sm:$0x3]
    %s815 = scalar_lea.vmem [#allocation2], 23
    %v816 = vld [vmem:[%s815] ss:$8 sm:$0x3]
    %s817 = scalar_lea.vmem %s3, 1792
    %v818 = vld [vmem:[%s817] sm:$0xff]
    %v819 = vld [vmem:[%s817 + $0x8] sm:$0xff]
    %v820 = vld [vmem:[%s817 + $0x10] sm:$0xff]
    %v821 = vld [vmem:[%s817 + $0x18] sm:$0xff]
    %v822 = vld [vmem:[%s817 + $0x20] sm:$0xff]
    %v823 = vld [vmem:[%s817 + $0x28] sm:$0xff]
    %v824 = vld [vmem:[%s817 + $0x30] sm:$0xff]
    %v825 = vld [vmem:[%s817 + $0x38] sm:$0xff]
    %v826 = vld [vmem:[%s817 + $0x40] sm:$0xff]
    %v827 = vld [vmem:[%s817 + $0x48] sm:$0xff]
    %v828 = vld [vmem:[%s817 + $0x50] sm:$0xff]
    %v829 = vld [vmem:[%s817 + $0x58] sm:$0xff]
    %v830 = vld [vmem:[%s817 + $0x60] sm:$0xff]
    %v831 = vld [vmem:[%s817 + $0x68] sm:$0xff]
    %v832 = vld [vmem:[%s817 + $0x70] sm:$0xff]
    %v833 = vld [vmem:[%s817 + $0x78] sm:$0xff]
    %v834 = vld [vmem:[%s817 + $0x80] sm:$0xff]
    %v835 = vld [vmem:[%s817 + $0x88] sm:$0xff]
    %v836 = vld [vmem:[%s817 + $0x90] sm:$0xff]
    %v837 = vld [vmem:[%s817 + $0x98] sm:$0xff]
    %v838 = vld [vmem:[%s817 + $0xa0] sm:$0xff]
    %v839 = vld [vmem:[%s817 + $0xa8] sm:$0xff]
    %v840 = vld [vmem:[%s817 + $0xb0] sm:$0xff]
    %v841 = vld [vmem:[%s817 + $0xb8] sm:$0xff]
    %v842 = vld [vmem:[%s817 + $0xc0] sm:$0xff]
    %v843 = vld [vmem:[%s817 + $0xc8] sm:$0xff]
    %v844 = vld [vmem:[%s817 + $0xd0] sm:$0xff]
    %v845 = vld [vmem:[%s817 + $0xd8] sm:$0xff]
    %v846 = vld [vmem:[%s817 + $0xe0] sm:$0xff]
    %v847 = vld [vmem:[%s817 + $0xe8] sm:$0xff]
    %v848 = vld [vmem:[%s817 + $0xf0] sm:$0xff]
    %v849 = vld [vmem:[%s817 + $0xf8] sm:$0xff]
    %852 = vst [vmem:[#allocation1] ss:$9 sm:$0xff] %v814
    %s853 = scalar_lea.vmem [#allocation1], 1
    %854 = vst [vmem:[%s853] ss:$9 sm:$0xff] %v816
    %v855 = vld [vmem:[#allocation1] sm:$0xff]
    %v856 = vld [vmem:[#allocation1 + $0x9] sm:$0xff]
    %859 = vmatpush.msra.mxu0 %v833
    %860 = vmatpush.msra.mxu0 %v832
    %861 = vmatpush.msra.mxu0 %v831
    %862 = vmatpush.msra.mxu0 %v830
    %863 = vmatpush.msra.mxu0 %v829
    %864 = vmatpush.msra.mxu0 %v828
    %865 = vmatpush.msra.mxu0 %v827
    %866 = vmatpush.msra.mxu0 %v826
    %867 = vmatpush.msra.mxu0 %v825
    %868 = vmatpush.msra.mxu0 %v824
    %869 = vmatpush.msra.mxu0 %v823
    %870 = vmatpush.msra.mxu0 %v822
    %871 = vmatpush.msra.mxu0 %v821
    %872 = vmatpush.msra.mxu0 %v820
    %873 = vmatpush.msra.mxu0 %v819
    %874 = vmatpush.msra.mxu0 %v818
    %875 = vmatmul.f32.gmra.mxu0 %v855
    %v876 = vpop.f32.mrf.mxu0
    %v877 = vadd.f32 0.0, %v876
    %878 = vdwg.mxu0
    %879 = vmatpush.msra.mxu0 %v849
    %880 = vmatpush.msra.mxu0 %v848
    %881 = vmatpush.msra.mxu0 %v847
    %882 = vmatpush.msra.mxu0 %v846
    %883 = vmatpush.msra.mxu0 %v845
    %884 = vmatpush.msra.mxu0 %v844
    %885 = vmatpush.msra.mxu0 %v843
    %886 = vmatpush.msra.mxu0 %v842
    %887 = vmatpush.msra.mxu0 %v841
    %888 = vmatpush.msra.mxu0 %v840
    %889 = vmatpush.msra.mxu0 %v839
    %890 = vmatpush.msra.mxu0 %v838
    %891 = vmatpush.msra.mxu0 %v837
    %892 = vmatpush.msra.mxu0 %v836
    %893 = vmatpush.msra.mxu0 %v835
    %894 = vmatpush.msra.mxu0 %v834
    %895 = vmatmul.f32.gmra.mxu0 %v856
    %v896 = vpop.f32.mrf.mxu0
    %v897 = vadd.f32 %v877, %v896
    %898 = vdwg.mxu0
    %v899 = vadd.f32 %v812, %v897
    %v900 = vld [vmem:[%s4] sm:$0x1]
    %v902 = vperm.slane %v900, 0
    %v904 = vadd.f32 %v899, %v902
    %v905 = vmul.f32 %v904, 0.00390625
    %v906 = vround.ne.pseudo %v905
    %v907 = vmax.f32 %v906, 0.0
    %v908 = vld [vmem:[%s5] sm:$0xff]
    %v909 = vld [vmem:[%s5 + $0x8] sm:$0xff]
    %v910 = vld [vmem:[%s5 + $0x10] sm:$0xff]
    %v911 = vld [vmem:[%s5 + $0x18] sm:$0xff]
    %v912 = vld [vmem:[%s5 + $0x20] sm:$0xff]
    %v913 = vld [vmem:[%s5 + $0x28] sm:$0xff]
    %v914 = vld [vmem:[%s5 + $0x30] sm:$0xff]
    %v915 = vld [vmem:[%s5 + $0x38] sm:$0xff]
    %v916 = vld [vmem:[%s5 + $0x40] sm:$0xff]
    %v917 = vld [vmem:[%s5 + $0x48] sm:$0xff]
    %v918 = vld [vmem:[%s5 + $0x50] sm:$0xff]
    %v919 = vld [vmem:[%s5 + $0x58] sm:$0xff]
    %v920 = vld [vmem:[%s5 + $0x60] sm:$0xff]
    %v921 = vld [vmem:[%s5 + $0x68] sm:$0xff]
    %v922 = vld [vmem:[%s5 + $0x70] sm:$0xff]
    %v923 = vld [vmem:[%s5 + $0x78] sm:$0xff]
    %v924 = vld [vmem:[%s6] sm:$0x1]
    %v926 = vperm.slane %v924, 0
    %928 = vmatpush.msra.mxu0 %v923
    %929 = vmatpush.msra.mxu0 %v922
    %930 = vmatpush.msra.mxu0 %v921
    %931 = vmatpush.msra.mxu0 %v920
    %932 = vmatpush.msra.mxu0 %v919
    %933 = vmatpush.msra.mxu0 %v918
    %934 = vmatpush.msra.mxu0 %v917
    %935 = vmatpush.msra.mxu0 %v916
    %936 = vmatpush.msra.mxu0 %v915
    %937 = vmatpush.msra.mxu0 %v914
    %938 = vmatpush.msra.mxu0 %v913
    %939 = vmatpush.msra.mxu0 %v912
    %940 = vmatpush.msra.mxu0 %v911
    %941 = vmatpush.msra.mxu0 %v910
    %942 = vmatpush.msra.mxu0 %v909
    %943 = vmatpush.msra.mxu0 %v908
    %944 = vmatmul.f32.gmra.mxu0 %v907
    %v945 = vpop.f32.mrf.mxu0
    %v946 = vadd.f32 %v926, %v945
    %947 = vdwg.mxu0
    %v948 = vmul.f32 %v946, 0.00390625
    %v949 = vround.ne.pseudo %v948
    %v950 = vmul.f32 %v949, 0.00390625
    %951 = vst [vmem:[#allocation3] sm:$0x3] %v950
    // Predicated region
    $region30: #{quantized_net_forward.1} parent=1 // pred_check
      _
    $region31: #{quantized_net_forward.1} parent=1 // pred_check_branch
      %953 = sbr.rel (0) target = $region33
    $region32: #{quantized_net_forward.1} parent=1 // pred_region
      %955 = vsyncadd [#allocation4], 0
      %s957 = sshll.u32 [#allocation3], 4
      %s958 = int_to_ptr.vmem [resolvable:$true] %s957
      %s959 = sshll.u32 %s7, 4
      %s960 = int_to_ptr.hbm [resolvable:$true] %s959
      %962 = dma.vmem_to_hbm [thread:$0]  %s958, 32, %s960, [#allocation4]
    $region33: #{quantized_net_forward.1} parent=1 // pred_fallthru
      _
    // Predicated region
    $region34: #{quantized_net_forward.1} parent=1 // pred_check
      _
    $region35: #{quantized_net_forward.1} parent=1 // pred_check_branch
      %964 = sbr.rel (0) target = $region37
    $region36: #{quantized_net_forward.1} parent=1 // pred_region
      %966 = dma.done [#allocation4], 32
    $region37: #{quantized_net_forward.1} parent=1 // pred_fallthru
      _
    %967 = vsyncpa [#allocation4], 1

</llo_original>
